<compile_context>
chip_gen: v6e
topology: v6e:2x2x1
jax: 0.10.0
libtpu: 0.0.40
codegen_flags: <defaults>
</compile_context>

<pallas_src>
import jax
import jax.numpy as jnp
from jax.experimental import pallas as pl
from jax.experimental.pallas import tpu as pltpu


def _round_up(x: int, m: int) -> int:
    return (x + m - 1) // m * m


def _round_down(x: int, m: int) -> int:
    return x // m * m


# ----------------------------- Pallas kernel --------------------------------
def classifier_kernel(x_ref, w_ref, b_ref, o_ref):
    # x_ref: (TB, D) scores tile (streamed from HBM)
    # w_ref: (8, D)  weight; row 0 is the real Linear weight, rows 1..7 zero
    # b_ref: (1,)    bias scalar in SMEM
    # o_ref: (1, TB) lane-dense sigmoid output row for this tile
    x = x_ref[...]
    w = w_ref[...]
    # (8, D) x (TB, D)^T -> (8, TB): contraction on the last dim of both
    # operands (the q @ k.T pattern), result is already lane-dense.
    acc = jax.lax.dot_general(
        w, x,
        dimension_numbers=(((1,), (1,)), ((), ())),
        preferred_element_type=jnp.float32,
        precision=jax.lax.Precision.HIGHEST,
    )
    logits = acc[0:1, :] + b_ref[0]          # (1, TB)
    o_ref[...] = jax.nn.sigmoid(logits)      # EUP; unmasked lane-dense store


# ------------------------------ JAX wrapper ---------------------------------
def egsc_classifier_forward(scores, weight, bias, *, block_b: int = 1024):
    """scores: [B, D], weight: [1, D] (torch Linear layout), bias: [1] -> [B]."""
    B, D = scores.shape
    in_dtype = scores.dtype
    itemsize = jnp.dtype(in_dtype).itemsize

    if B <= block_b:
        # Single tile covering the whole batch: block == full array dims, so
        # no alignment constraint and no padding at all.
        TB = B
        grid_b = 1
    else:
        # Multi-tile: lane-aligned tile width (output blocks are (1, TB)),
        # capped so 2 x TB x D x itemsize stays under ~8 MiB (v5e-safe).
        vmem_cap_rows = max(128, _round_down(8 * 1024 * 1024 // (2 * D * itemsize), 128))
        TB = max(128, _round_down(min(block_b, vmem_cap_rows), 128))
        grid_b = pl.cdiv(B, TB)
    Bp = grid_b * TB

    # Tiny operands only: weight padded to 8 sublanes (rows 1..7 zero), bias
    # as a 1-element SMEM scalar.  The large `scores` tensor is NOT copied.
    w8 = jnp.zeros((8, D), in_dtype).at[0, :].set(
        weight.reshape(-1).astype(in_dtype))
    b = jnp.asarray(bias, jnp.float32).reshape(1,)

    cost = pl.CostEstimate(
        flops=2 * B * D,
        transcendentals=B,
        bytes_accessed=itemsize * B * D + 4 * (8 * D + 1 + B),
    )

    out = pl.pallas_call(
        classifier_kernel,
        out_shape=jax.ShapeDtypeStruct((1, Bp), jnp.float32),
        grid_spec=pltpu.PrefetchScalarGridSpec(
            num_scalar_prefetch=0,
            grid=(grid_b,),
            in_specs=[
                pl.BlockSpec((TB, D), lambda i: (i, 0)),             # scores tile
                pl.BlockSpec((8, D), lambda i: (0, 0)),              # weight (replicated)
                pl.BlockSpec(memory_space=pltpu.MemorySpace.SMEM),   # bias scalar
            ],
            out_specs=pl.BlockSpec((1, TB), lambda i: (0, i)),       # lane-dense row
        ),
        compiler_params=pltpu.CompilerParams(
            dimension_semantics=("parallel",),
        ),
        cost_estimate=cost,
    )(scores, w8, b)

    # .view(-1) in torch; drop any padding of the last ragged tile.
    return out.reshape(-1)[:B]


# --------------------------- pure-JAX reference ------------------------------
def egsc_classifier_reference(scores, weight, bias):
    logits = jnp.sum(scores.astype(jnp.float32)
                     * weight.reshape(1, -1).astype(jnp.float32), axis=1)
    return jax.nn.sigmoid(logits + jnp.asarray(bias, jnp.float32)[0])


# --------------------------------- main --------------------------------------
if __name__ == "__main__":
    BOTTLE_NECK = 16   # args.bottle_neck_neurons (EGSC default)
    BATCH = 128        # number of score vectors (graph pairs) per call

    key = jax.random.PRNGKey(0)
    k1, k2, k3 = jax.random.split(key, 3)

    scores = jax.random.normal(k1, (BATCH, BOTTLE_NECK), dtype=jnp.float32)
    # torch.nn.Linear(bottle_neck_neurons, 1): weight [1, D], bias [1]
    weight = 0.1 * jax.random.normal(k2, (1, BOTTLE_NECK), dtype=jnp.float32)
    bias = 0.1 * jax.random.normal(k3, (1,), dtype=jnp.float32)

    out = egsc_classifier_forward(scores, weight, bias)
    out = jax.block_until_ready(out)

    ref = egsc_classifier_reference(scores, weight, bias)
    assert out.shape == (BATCH,), out.shape
    assert jnp.allclose(out, ref, atol=5e-4, rtol=1e-3), float(
        jnp.max(jnp.abs(out - ref)))

    print("KERNEL_OK")
</pallas_src>

<mosaic_0001>
module attributes {stable_mosaic.version = 11 : i64} {
  func.func @classifier_kernel(%arg0: i32, %arg1: memref<128x16xf32, #tpu.memory_space<vmem>>, %arg2: memref<8x16xf32, #tpu.memory_space<vmem>>, %arg3: memref<1xf32, #tpu.memory_space<smem>>, %arg4: memref<1x128xf32, #tpu.memory_space<vmem>>) attributes {dimension_semantics = [#tpu.dimension_semantics<parallel>], iteration_bounds = array<i64: 1>, scalar_prefetch = 0 : i64, scratch_operands = 0 : i64, tpu.core_type = #tpu.core_type<tc>, window_params = [{transform_indices = @transform_0, window_bounds = array<i64: 128, 16>}, {pipeline_mode = #tpu.pipeline_mode<synchronous>, transform_indices = @transform_1, window_bounds = array<i64: 8, 16>}, {transform_indices = @transform_2, window_bounds = array<i64: 1>}, {transform_indices = @transform_3, window_bounds = array<i64: 1, 128>}]} {
    %c0 = arith.constant 0 : index
    %c0_0 = arith.constant 0 : index
    %0 = vector.load %arg1[%c0, %c0_0] : memref<128x16xf32, #tpu.memory_space<vmem>>, vector<128x16xf32>
    %c0_1 = arith.constant 0 : index
    %c0_2 = arith.constant 0 : index
    %1 = vector.load %arg2[%c0_1, %c0_2] : memref<8x16xf32, #tpu.memory_space<vmem>>, vector<8x16xf32>
    %cst = arith.constant dense<0.000000e+00> : vector<8x128xf32>
    %2 = tpu.matmul %1, %0, %cst {dimension_numbers = #tpu.dot_dimension_numbers<[1], [1], [0], [0], [0, 0, 1, 0], [], []>, precision = #tpu.contract_precision<fp32>} : vector<8x16xf32>, vector<128x16xf32>, vector<8x128xf32> -> vector<8x128xf32>
    %3 = vector.extract_strided_slice %2 {offsets = [0, 0], sizes = [1, 128], strides = [1, 1]} : vector<8x128xf32> to vector<1x128xf32>
    %c0_3 = arith.constant 0 : index
    %4 = memref.load %arg3[%c0_3] : memref<1xf32, #tpu.memory_space<smem>>
    %5 = vector.broadcast %4 : f32 to vector<1x128xf32>
    %6 = arith.addf %3, %5 : vector<1x128xf32>
    %7 = arith.negf %6 : vector<1x128xf32>
    %8 = math.exp %7 : vector<1x128xf32>
    %cst_4 = arith.constant 1.000000e+00 : f32
    %9 = vector.broadcast %cst_4 : f32 to vector<1x128xf32>
    %10 = arith.addf %9, %8 : vector<1x128xf32>
    %11 = arith.divf %9, %10 : vector<1x128xf32>
    %c0_5 = arith.constant 0 : index
    %c0_6 = arith.constant 0 : index
    %12 = vector.load %arg4[%c0_5, %c0_6] : memref<1x128xf32, #tpu.memory_space<vmem>>, vector<1x128xf32>
    tpu.vector_store %arg4[%c0_5, %c0_6], %11 {strides = array<i32>} : memref<1x128xf32, #tpu.memory_space<vmem>>, vector<1x128xf32>,
    return
  }
  func.func @transform_0(%arg0: i32) -> (i32, i32) {
    %c0_i32 = arith.constant 0 : i32
    %c0_i32_0 = arith.constant 0 : i32
    return %arg0, %c0_i32 : i32, i32
  }
  func.func @transform_1(%arg0: i32) -> (i32, i32) {
    %c0_i32 = arith.constant 0 : i32
    %c0_i32_0 = arith.constant 0 : i32
    %c0_i32_1 = arith.constant 0 : i32
    return %c0_i32, %c0_i32_0 : i32, i32
  }
  func.func @transform_2(%arg0: i32) -> i32 {
    %c0_i32 = arith.constant 0 : i32
    %c0_i32_0 = arith.constant 0 : i32
    return %c0_i32 : i32
  }
  func.func @transform_3(%arg0: i32) -> (i32, i32) {
    %c0_i32 = arith.constant 0 : i32
    %c0_i32_0 = arith.constant 0 : i32
    return %c0_i32, %arg0 : i32, i32
  }
}

</mosaic_0001>

<llo_original>
// kernel: tpu_custom_call.1
$region0: #{tpu_custom_call.1}
  #allocation0 [shape = 'u32[]', space=smem, size = 0x4, offset = 0x4, fixed_abs, tag = 'smem constant byte address 0x4 - core index']
  #allocation1 [shape = 'u32[144,128]{1,0:T(1,128)}', space=vmem, size = 0x12000, scoped, tag = 'internal scratch']
  #allocation2 [shape = 'f32[1]{0:T(128)S(6)}', space=smem, size = 0x200, scoped, tag = 'scoped memory for tpu_custom_call.1']
  %s0 = inlined_call_operand.vmem [shape: f32[128,16], index: 0, kind: input, shape index: {}]
  %s1 = inlined_call_operand.vmem [shape: f32[8,16], index: 1, kind: input, shape index: {}]
  %s2 = inlined_call_operand.<no memory space> [shape: f32[1], index: 2, kind: input, shape index: {}]
  %s3 = inlined_call_operand.hbm [shape: f32[1,128], index: 3, kind: output, shape index: {}]
  %s4 = sld [smem:[#allocation0]]
  $region22: #{tpu_custom_call.1} parent=0
    _
  %s6 = ssub.s32 1, %s4
  %s7 = scalar_select 0, %s6, %s4
  %8 = sst [smem:[#allocation2]] %s2
  $region1: #{tpu_custom_call.1} parent=0
    #allocation3 [shape = 'u8[512]{0}', space=vmem, size = 0x400, scoped, tag = 'output window, operand 0, single buffered']
    #allocation4 [shape = 's32[1]{0}', space=sflag, size = 0x4, scoped, tag = 'scoped memory for tpu_custom_call.1']
    %9 = vsyncpa [#allocation4], 0
    // Predicated region
    $region2: #{tpu_custom_call.1} parent=1 // pred_check
      _
    $region3: #{tpu_custom_call.1} parent=1 // pred_check_branch
      %11 = sbr.rel (0) target = $region5
    $region4: #{tpu_custom_call.1} parent=1 // pred_region
      _
    $region5: #{tpu_custom_call.1} parent=1 // pred_fallthru
      _
    // Predicated region
    $region6: #{tpu_custom_call.1} parent=1 // pred_check
      _
    $region7: #{tpu_custom_call.1} parent=1 // pred_check_branch
      %13 = sbr.rel (0) target = $region9
    $region8: #{tpu_custom_call.1} parent=1 // pred_region
      _
    $region9: #{tpu_custom_call.1} parent=1 // pred_fallthru
      _
    // Predicated region
    $region10: #{tpu_custom_call.1} parent=1 // pred_check
      _
    $region11: #{tpu_custom_call.1} parent=1 // pred_check_branch
      %15 = sbr.rel (0) target = $region13
    $region12: #{tpu_custom_call.1} parent=1 // pred_region
      _
    $region13: #{tpu_custom_call.1} parent=1 // pred_fallthru
      _
    %v16 = vld [vmem:[%s0] sm:$0xff]
    %v17 = vld [vmem:[%s0 + $0x8] sm:$0xff]
    %v18 = vld [vmem:[%s0 + $0x10] sm:$0xff]
    %v19 = vld [vmem:[%s0 + $0x18] sm:$0xff]
    %v20 = vld [vmem:[%s0 + $0x20] sm:$0xff]
    %v21 = vld [vmem:[%s0 + $0x28] sm:$0xff]
    %v22 = vld [vmem:[%s0 + $0x30] sm:$0xff]
    %v23 = vld [vmem:[%s0 + $0x38] sm:$0xff]
    %v24 = vld [vmem:[%s0 + $0x40] sm:$0xff]
    %v25 = vld [vmem:[%s0 + $0x48] sm:$0xff]
    %v26 = vld [vmem:[%s0 + $0x50] sm:$0xff]
    %v27 = vld [vmem:[%s0 + $0x58] sm:$0xff]
    %v28 = vld [vmem:[%s0 + $0x60] sm:$0xff]
    %v29 = vld [vmem:[%s0 + $0x68] sm:$0xff]
    %v30 = vld [vmem:[%s0 + $0x70] sm:$0xff]
    %v31 = vld [vmem:[%s0 + $0x78] sm:$0xff]
    %v32 = vld [vmem:[%s1] sm:$0xff]
    %vm33 = vcmask 130048
    %v35 = vsel %vm33, %v32, 0
    %v38 = vsel %vm33, %v16, 0
    %v41 = vsel %vm33, %v17, 0
    %v44 = vsel %vm33, %v18, 0
    %v47 = vsel %vm33, %v19, 0
    %v50 = vsel %vm33, %v20, 0
    %v53 = vsel %vm33, %v21, 0
    %v56 = vsel %vm33, %v22, 0
    %v59 = vsel %vm33, %v23, 0
    %v62 = vsel %vm33, %v24, 0
    %v65 = vsel %vm33, %v25, 0
    %v68 = vsel %vm33, %v26, 0
    %v71 = vsel %vm33, %v27, 0
    %v74 = vsel %vm33, %v28, 0
    %v77 = vsel %vm33, %v29, 0
    %v80 = vsel %vm33, %v30, 0
    %v83 = vsel %vm33, %v31, 0
    %85 = vmatprep.subr.mxu0 0.0
    %v86 = vand.u32 %v83, 4294901760
    %87 = vmatpush1.xpose.msra.mxu0 %v86
    %88 = vmatprep.subr.mxu0 0.0
    %v89 = vand.u32 %v80, 4294901760
    %90 = vmatpush1.xpose.msra.mxu0 %v89
    %91 = vmatprep.subr.mxu0 0.0
    %v92 = vand.u32 %v77, 4294901760
    %93 = vmatpush1.xpose.msra.mxu0 %v92
    %94 = vmatprep.subr.mxu0 0.0
    %v95 = vand.u32 %v74, 4294901760
    %96 = vmatpush1.xpose.msra.mxu0 %v95
    %97 = vmatprep.subr.mxu0 0.0
    %v98 = vand.u32 %v71, 4294901760
    %99 = vmatpush1.xpose.msra.mxu0 %v98
    %100 = vmatprep.subr.mxu0 0.0
    %v101 = vand.u32 %v68, 4294901760
    %102 = vmatpush1.xpose.msra.mxu0 %v101
    %103 = vmatprep.subr.mxu0 0.0
    %v104 = vand.u32 %v65, 4294901760
    %105 = vmatpush1.xpose.msra.mxu0 %v104
    %106 = vmatprep.subr.mxu0 0.0
    %v107 = vand.u32 %v62, 4294901760
    %108 = vmatpush1.xpose.msra.mxu0 %v107
    %109 = vmatprep.subr.mxu0 0.0
    %v110 = vand.u32 %v59, 4294901760
    %111 = vmatpush1.xpose.msra.mxu0 %v110
    %112 = vmatprep.subr.mxu0 0.0
    %v113 = vand.u32 %v56, 4294901760
    %114 = vmatpush1.xpose.msra.mxu0 %v113
    %115 = vmatprep.subr.mxu0 0.0
    %v116 = vand.u32 %v53, 4294901760
    %117 = vmatpush1.xpose.msra.mxu0 %v116
    %118 = vmatprep.subr.mxu0 0.0
    %v119 = vand.u32 %v50, 4294901760
    %120 = vmatpush1.xpose.msra.mxu0 %v119
    %121 = vmatprep.subr.mxu0 0.0
    %v122 = vand.u32 %v47, 4294901760
    %123 = vmatpush1.xpose.msra.mxu0 %v122
    %124 = vmatprep.subr.mxu0 0.0
    %v125 = vand.u32 %v44, 4294901760
    %126 = vmatpush1.xpose.msra.mxu0 %v125
    %127 = vmatprep.subr.mxu0 0.0
    %v128 = vand.u32 %v41, 4294901760
    %129 = vmatpush1.xpose.msra.mxu0 %v128
    %130 = vmatprep.subr.mxu0 0.0
    %v131 = vand.u32 %v38, 4294901760
    %132 = vmatpush1.xpose.msra.mxu0 %v131
    %133 = vmatprep.subr.mxu0 0.0
    %134 = vmatpush2.xpose.msra.mxu0 0.0
    %135 = vmatprep.subr.mxu0 0.0
    %136 = vmatpush2.xpose.msra.mxu0 0.0
    %137 = vmatprep.subr.mxu0 0.0
    %138 = vmatpush2.xpose.msra.mxu0 0.0
    %139 = vmatprep.subr.mxu0 0.0
    %140 = vmatpush2.xpose.msra.mxu0 0.0
    %141 = vmatprep.subr.mxu0 0.0
    %142 = vmatpush2.xpose.msra.mxu0 0.0
    %143 = vmatprep.subr.mxu0 0.0
    %144 = vmatpush2.xpose.msra.mxu0 0.0
    %145 = vmatprep.subr.mxu0 0.0
    %146 = vmatpush2.xpose.msra.mxu0 0.0
    %147 = vmatprep.subr.mxu0 0.0
    %148 = vmatpush2.xpose.msra.mxu0 0.0
    %149 = vmatprep.subr.mxu0 0.0
    %150 = vmatpush2.xpose.msra.mxu0 0.0
    %151 = vmatprep.subr.mxu0 0.0
    %152 = vmatpush2.xpose.msra.mxu0 0.0
    %153 = vmatprep.subr.mxu0 0.0
    %154 = vmatpush2.xpose.msra.mxu0 0.0
    %155 = vmatprep.subr.mxu0 0.0
    %156 = vmatpush2.xpose.msra.mxu0 0.0
    %157 = vmatprep.subr.mxu0 0.0
    %158 = vmatpush2.xpose.msra.mxu0 0.0
    %159 = vmatprep.subr.mxu0 0.0
    %160 = vmatpush2.xpose.msra.mxu0 0.0
    %161 = vmatprep.subr.mxu0 0.0
    %162 = vmatpush2.xpose.msra.mxu0 0.0
    %163 = vmatprep.subr.mxu0 0.0
    %164 = vmatpush2.xpose.msra.mxu0 0.0
    %165 = vmatprep.mubr.f32.mxu0 0.0
    %v166 = vand.u32 %v35, 4294901760
    %v167 = vsub.f32 %v35, %v166
    %v168 = vand.u32 %v167, 4294901760
    %v169 = vsub.f32 %v167, %v168
    %v170 = vand.u32 %v169, 4294901760
    %171 = vmatmul.mubr.f32.gmra.mxu0 %v170
    %v172 = vpop.f32.mrf.mxu0
    %v173 = vadd.f32 0.0, %v172
    %v174 = vpop.f32.mrf.mxu0
    %175 = vdwg.mxu0
    %176 = vmatprep.subr.mxu0 0.0
    %v177 = vand.u32 %v83, 4294901760
    %v178 = vsub.f32 %v83, %v177
    %v179 = vand.u32 %v178, 4294901760
    %v180 = vsub.f32 %v178, %v179
    %v181 = vand.u32 %v180, 4294901760
    %182 = vmatpush1.xpose.msra.mxu0 %v181
    %183 = vmatprep.subr.mxu0 0.0
    %v184 = vand.u32 %v80, 4294901760
    %v185 = vsub.f32 %v80, %v184
    %v186 = vand.u32 %v185, 4294901760
    %v187 = vsub.f32 %v185, %v186
    %v188 = vand.u32 %v187, 4294901760
    %189 = vmatpush1.xpose.msra.mxu0 %v188
    %190 = vmatprep.subr.mxu0 0.0
    %v191 = vand.u32 %v77, 4294901760
    %v192 = vsub.f32 %v77, %v191
    %v193 = vand.u32 %v192, 4294901760
    %v194 = vsub.f32 %v192, %v193
    %v195 = vand.u32 %v194, 4294901760
    %196 = vmatpush1.xpose.msra.mxu0 %v195
    %197 = vmatprep.subr.mxu0 0.0
    %v198 = vand.u32 %v74, 4294901760
    %v199 = vsub.f32 %v74, %v198
    %v200 = vand.u32 %v199, 4294901760
    %v201 = vsub.f32 %v199, %v200
    %v202 = vand.u32 %v201, 4294901760
    %203 = vmatpush1.xpose.msra.mxu0 %v202
    %204 = vmatprep.subr.mxu0 0.0
    %v205 = vand.u32 %v71, 4294901760
    %v206 = vsub.f32 %v71, %v205
    %v207 = vand.u32 %v206, 4294901760
    %v208 = vsub.f32 %v206, %v207
    %v209 = vand.u32 %v208, 4294901760
    %210 = vmatpush1.xpose.msra.mxu0 %v209
    %211 = vmatprep.subr.mxu0 0.0
    %v212 = vand.u32 %v68, 4294901760
    %v213 = vsub.f32 %v68, %v212
    %v214 = vand.u32 %v213, 4294901760
    %v215 = vsub.f32 %v213, %v214
    %v216 = vand.u32 %v215, 4294901760
    %217 = vmatpush1.xpose.msra.mxu0 %v216
    %218 = vmatprep.subr.mxu0 0.0
    %v219 = vand.u32 %v65, 4294901760
    %v220 = vsub.f32 %v65, %v219
    %v221 = vand.u32 %v220, 4294901760
    %v222 = vsub.f32 %v220, %v221
    %v223 = vand.u32 %v222, 4294901760
    %224 = vmatpush1.xpose.msra.mxu0 %v223
    %225 = vmatprep.subr.mxu0 0.0
    %v226 = vand.u32 %v62, 4294901760
    %v227 = vsub.f32 %v62, %v226
    %v228 = vand.u32 %v227, 4294901760
    %v229 = vsub.f32 %v227, %v228
    %v230 = vand.u32 %v229, 4294901760
    %231 = vmatpush1.xpose.msra.mxu0 %v230
    %232 = vmatprep.subr.mxu0 0.0
    %v233 = vand.u32 %v59, 4294901760
    %v234 = vsub.f32 %v59, %v233
    %v235 = vand.u32 %v234, 4294901760
    %v236 = vsub.f32 %v234, %v235
    %v237 = vand.u32 %v236, 4294901760
    %238 = vmatpush1.xpose.msra.mxu0 %v237
    %239 = vmatprep.subr.mxu0 0.0
    %v240 = vand.u32 %v56, 4294901760
    %v241 = vsub.f32 %v56, %v240
    %v242 = vand.u32 %v241, 4294901760
    %v243 = vsub.f32 %v241, %v242
    %v244 = vand.u32 %v243, 4294901760
    %245 = vmatpush1.xpose.msra.mxu0 %v244
    %246 = vmatprep.subr.mxu0 0.0
    %v247 = vand.u32 %v53, 4294901760
    %v248 = vsub.f32 %v53, %v247
    %v249 = vand.u32 %v248, 4294901760
    %v250 = vsub.f32 %v248, %v249
    %v251 = vand.u32 %v250, 4294901760
    %252 = vmatpush1.xpose.msra.mxu0 %v251
    %253 = vmatprep.subr.mxu0 0.0
    %v254 = vand.u32 %v50, 4294901760
    %v255 = vsub.f32 %v50, %v254
    %v256 = vand.u32 %v255, 4294901760
    %v257 = vsub.f32 %v255, %v256
    %v258 = vand.u32 %v257, 4294901760
    %259 = vmatpush1.xpose.msra.mxu0 %v258
    %260 = vmatprep.subr.mxu0 0.0
    %v261 = vand.u32 %v47, 4294901760
    %v262 = vsub.f32 %v47, %v261
    %v263 = vand.u32 %v262, 4294901760
    %v264 = vsub.f32 %v262, %v263
    %v265 = vand.u32 %v264, 4294901760
    %266 = vmatpush1.xpose.msra.mxu0 %v265
    %267 = vmatprep.subr.mxu0 0.0
    %v268 = vand.u32 %v44, 4294901760
    %v269 = vsub.f32 %v44, %v268
    %v270 = vand.u32 %v269, 4294901760
    %v271 = vsub.f32 %v269, %v270
    %v272 = vand.u32 %v271, 4294901760
    %273 = vmatpush1.xpose.msra.mxu0 %v272
    %274 = vmatprep.subr.mxu0 0.0
    %v275 = vand.u32 %v41, 4294901760
    %v276 = vsub.f32 %v41, %v275
    %v277 = vand.u32 %v276, 4294901760
    %v278 = vsub.f32 %v276, %v277
    %v279 = vand.u32 %v278, 4294901760
    %280 = vmatpush1.xpose.msra.mxu0 %v279
    %281 = vmatprep.subr.mxu0 0.0
    %v282 = vand.u32 %v38, 4294901760
    %v283 = vsub.f32 %v38, %v282
    %v284 = vand.u32 %v283, 4294901760
    %v285 = vsub.f32 %v283, %v284
    %v286 = vand.u32 %v285, 4294901760
    %287 = vmatpush1.xpose.msra.mxu0 %v286
    %288 = vmatprep.subr.mxu0 0.0
    %289 = vmatpush2.xpose.msra.mxu0 0.0
    %290 = vmatprep.subr.mxu0 0.0
    %291 = vmatpush2.xpose.msra.mxu0 0.0
    %292 = vmatprep.subr.mxu0 0.0
    %293 = vmatpush2.xpose.msra.mxu0 0.0
    %294 = vmatprep.subr.mxu0 0.0
    %295 = vmatpush2.xpose.msra.mxu0 0.0
    %296 = vmatprep.subr.mxu0 0.0
    %297 = vmatpush2.xpose.msra.mxu0 0.0
    %298 = vmatprep.subr.mxu0 0.0
    %299 = vmatpush2.xpose.msra.mxu0 0.0
    %300 = vmatprep.subr.mxu0 0.0
    %301 = vmatpush2.xpose.msra.mxu0 0.0
    %302 = vmatprep.subr.mxu0 0.0
    %303 = vmatpush2.xpose.msra.mxu0 0.0
    %304 = vmatprep.subr.mxu0 0.0
    %305 = vmatpush2.xpose.msra.mxu0 0.0
    %306 = vmatprep.subr.mxu0 0.0
    %307 = vmatpush2.xpose.msra.mxu0 0.0
    %308 = vmatprep.subr.mxu0 0.0
    %309 = vmatpush2.xpose.msra.mxu0 0.0
    %310 = vmatprep.subr.mxu0 0.0
    %311 = vmatpush2.xpose.msra.mxu0 0.0
    %312 = vmatprep.subr.mxu0 0.0
    %313 = vmatpush2.xpose.msra.mxu0 0.0
    %314 = vmatprep.subr.mxu0 0.0
    %315 = vmatpush2.xpose.msra.mxu0 0.0
    %316 = vmatprep.subr.mxu0 0.0
    %317 = vmatpush2.xpose.msra.mxu0 0.0
    %318 = vmatprep.subr.mxu0 0.0
    %319 = vmatpush2.xpose.msra.mxu0 0.0
    %320 = vmatprep.mubr.f32.mxu0 0.0
    %v321 = vand.u32 %v35, 4294901760
    %322 = vmatmul.mubr.f32.gmra.mxu0 %v321
    %v323 = vpop.f32.mrf.mxu0
    %v324 = vadd.f32 %v173, %v323
    %v325 = vpop.f32.mrf.mxu0
    %326 = vdwg.mxu0
    %327 = vmatprep.subr.mxu0 0.0
    %v328 = vand.u32 %v83, 4294901760
    %v329 = vsub.f32 %v83, %v328
    %330 = vmatpush1.xpose.msra.mxu0 %v329
    %331 = vmatprep.subr.mxu0 0.0
    %v332 = vand.u32 %v80, 4294901760
    %v333 = vsub.f32 %v80, %v332
    %334 = vmatpush1.xpose.msra.mxu0 %v333
    %335 = vmatprep.subr.mxu0 0.0
    %v336 = vand.u32 %v77, 4294901760
    %v337 = vsub.f32 %v77, %v336
    %338 = vmatpush1.xpose.msra.mxu0 %v337
    %339 = vmatprep.subr.mxu0 0.0
    %v340 = vand.u32 %v74, 4294901760
    %v341 = vsub.f32 %v74, %v340
    %342 = vmatpush1.xpose.msra.mxu0 %v341
    %343 = vmatprep.subr.mxu0 0.0
    %v344 = vand.u32 %v71, 4294901760
    %v345 = vsub.f32 %v71, %v344
    %346 = vmatpush1.xpose.msra.mxu0 %v345
    %347 = vmatprep.subr.mxu0 0.0
    %v348 = vand.u32 %v68, 4294901760
    %v349 = vsub.f32 %v68, %v348
    %350 = vmatpush1.xpose.msra.mxu0 %v349
    %351 = vmatprep.subr.mxu0 0.0
    %v352 = vand.u32 %v65, 4294901760
    %v353 = vsub.f32 %v65, %v352
    %354 = vmatpush1.xpose.msra.mxu0 %v353
    %355 = vmatprep.subr.mxu0 0.0
    %v356 = vand.u32 %v62, 4294901760
    %v357 = vsub.f32 %v62, %v356
    %358 = vmatpush1.xpose.msra.mxu0 %v357
    %359 = vmatprep.subr.mxu0 0.0
    %v360 = vand.u32 %v59, 4294901760
    %v361 = vsub.f32 %v59, %v360
    %362 = vmatpush1.xpose.msra.mxu0 %v361
    %363 = vmatprep.subr.mxu0 0.0
    %v364 = vand.u32 %v56, 4294901760
    %v365 = vsub.f32 %v56, %v364
    %366 = vmatpush1.xpose.msra.mxu0 %v365
    %367 = vmatprep.subr.mxu0 0.0
    %v368 = vand.u32 %v53, 4294901760
    %v369 = vsub.f32 %v53, %v368
    %370 = vmatpush1.xpose.msra.mxu0 %v369
    %371 = vmatprep.subr.mxu0 0.0
    %v372 = vand.u32 %v50, 4294901760
    %v373 = vsub.f32 %v50, %v372
    %374 = vmatpush1.xpose.msra.mxu0 %v373
    %375 = vmatprep.subr.mxu0 0.0
    %v376 = vand.u32 %v47, 4294901760
    %v377 = vsub.f32 %v47, %v376
    %378 = vmatpush1.xpose.msra.mxu0 %v377
    %379 = vmatprep.subr.mxu0 0.0
    %v380 = vand.u32 %v44, 4294901760
    %v381 = vsub.f32 %v44, %v380
    %382 = vmatpush1.xpose.msra.mxu0 %v381
    %383 = vmatprep.subr.mxu0 0.0
    %v384 = vand.u32 %v41, 4294901760
    %v385 = vsub.f32 %v41, %v384
    %386 = vmatpush1.xpose.msra.mxu0 %v385
    %387 = vmatprep.subr.mxu0 0.0
    %v388 = vand.u32 %v38, 4294901760
    %v389 = vsub.f32 %v38, %v388
    %390 = vmatpush1.xpose.msra.mxu0 %v389
    %391 = vmatprep.subr.mxu0 0.0
    %392 = vmatpush2.xpose.msra.mxu0 0.0
    %393 = vmatprep.subr.mxu0 0.0
    %394 = vmatpush2.xpose.msra.mxu0 0.0
    %395 = vmatprep.subr.mxu0 0.0
    %396 = vmatpush2.xpose.msra.mxu0 0.0
    %397 = vmatprep.subr.mxu0 0.0
    %398 = vmatpush2.xpose.msra.mxu0 0.0
    %399 = vmatprep.subr.mxu0 0.0
    %400 = vmatpush2.xpose.msra.mxu0 0.0
    %401 = vmatprep.subr.mxu0 0.0
    %402 = vmatpush2.xpose.msra.mxu0 0.0
    %403 = vmatprep.subr.mxu0 0.0
    %404 = vmatpush2.xpose.msra.mxu0 0.0
    %405 = vmatprep.subr.mxu0 0.0
    %406 = vmatpush2.xpose.msra.mxu0 0.0
    %407 = vmatprep.subr.mxu0 0.0
    %408 = vmatpush2.xpose.msra.mxu0 0.0
    %409 = vmatprep.subr.mxu0 0.0
    %410 = vmatpush2.xpose.msra.mxu0 0.0
    %411 = vmatprep.subr.mxu0 0.0
    %412 = vmatpush2.xpose.msra.mxu0 0.0
    %413 = vmatprep.subr.mxu0 0.0
    %414 = vmatpush2.xpose.msra.mxu0 0.0
    %415 = vmatprep.subr.mxu0 0.0
    %416 = vmatpush2.xpose.msra.mxu0 0.0
    %417 = vmatprep.subr.mxu0 0.0
    %418 = vmatpush2.xpose.msra.mxu0 0.0
    %419 = vmatprep.subr.mxu0 0.0
    %420 = vmatpush2.xpose.msra.mxu0 0.0
    %421 = vmatprep.subr.mxu0 0.0
    %422 = vmatpush2.xpose.msra.mxu0 0.0
    %423 = vmatprep.mubr.f32.mxu0 0.0
    %v424 = vand.u32 %v35, 4294901760
    %v425 = vsub.f32 %v35, %v424
    %426 = vmatmul.mubr.f32.gmra.mxu0 %v425
    %v427 = vpop.f32.mrf.mxu0
    %v428 = vadd.f32 %v324, %v427
    %v429 = vpop.f32.mrf.mxu0
    %430 = vdwg.mxu0
    %431 = vmatprep.subr.mxu0 0.0
    %v432 = vand.u32 %v83, 4294901760
    %433 = vmatpush1.xpose.msra.mxu0 %v432
    %434 = vmatprep.subr.mxu0 0.0
    %v435 = vand.u32 %v80, 4294901760
    %436 = vmatpush1.xpose.msra.mxu0 %v435
    %437 = vmatprep.subr.mxu0 0.0
    %v438 = vand.u32 %v77, 4294901760
    %439 = vmatpush1.xpose.msra.mxu0 %v438
    %440 = vmatprep.subr.mxu0 0.0
    %v441 = vand.u32 %v74, 4294901760
    %442 = vmatpush1.xpose.msra.mxu0 %v441
    %443 = vmatprep.subr.mxu0 0.0
    %v444 = vand.u32 %v71, 4294901760
    %445 = vmatpush1.xpose.msra.mxu0 %v444
    %446 = vmatprep.subr.mxu0 0.0
    %v447 = vand.u32 %v68, 4294901760
    %448 = vmatpush1.xpose.msra.mxu0 %v447
    %449 = vmatprep.subr.mxu0 0.0
    %v450 = vand.u32 %v65, 4294901760
    %451 = vmatpush1.xpose.msra.mxu0 %v450
    %452 = vmatprep.subr.mxu0 0.0
    %v453 = vand.u32 %v62, 4294901760
    %454 = vmatpush1.xpose.msra.mxu0 %v453
    %455 = vmatprep.subr.mxu0 0.0
    %v456 = vand.u32 %v59, 4294901760
    %457 = vmatpush1.xpose.msra.mxu0 %v456
    %458 = vmatprep.subr.mxu0 0.0
    %v459 = vand.u32 %v56, 4294901760
    %460 = vmatpush1.xpose.msra.mxu0 %v459
    %461 = vmatprep.subr.mxu0 0.0
    %v462 = vand.u32 %v53, 4294901760
    %463 = vmatpush1.xpose.msra.mxu0 %v462
    %464 = vmatprep.subr.mxu0 0.0
    %v465 = vand.u32 %v50, 4294901760
    %466 = vmatpush1.xpose.msra.mxu0 %v465
    %467 = vmatprep.subr.mxu0 0.0
    %v468 = vand.u32 %v47, 4294901760
    %469 = vmatpush1.xpose.msra.mxu0 %v468
    %470 = vmatprep.subr.mxu0 0.0
    %v471 = vand.u32 %v44, 4294901760
    %472 = vmatpush1.xpose.msra.mxu0 %v471
    %473 = vmatprep.subr.mxu0 0.0
    %v474 = vand.u32 %v41, 4294901760
    %475 = vmatpush1.xpose.msra.mxu0 %v474
    %476 = vmatprep.subr.mxu0 0.0
    %v477 = vand.u32 %v38, 4294901760
    %478 = vmatpush1.xpose.msra.mxu0 %v477
    %479 = vmatprep.subr.mxu0 0.0
    %480 = vmatpush2.xpose.msra.mxu0 0.0
    %481 = vmatprep.subr.mxu0 0.0
    %482 = vmatpush2.xpose.msra.mxu0 0.0
    %483 = vmatprep.subr.mxu0 0.0
    %484 = vmatpush2.xpose.msra.mxu0 0.0
    %485 = vmatprep.subr.mxu0 0.0
    %486 = vmatpush2.xpose.msra.mxu0 0.0
    %487 = vmatprep.subr.mxu0 0.0
    %488 = vmatpush2.xpose.msra.mxu0 0.0
    %489 = vmatprep.subr.mxu0 0.0
    %490 = vmatpush2.xpose.msra.mxu0 0.0
    %491 = vmatprep.subr.mxu0 0.0
    %492 = vmatpush2.xpose.msra.mxu0 0.0
    %493 = vmatprep.subr.mxu0 0.0
    %494 = vmatpush2.xpose.msra.mxu0 0.0
    %495 = vmatprep.subr.mxu0 0.0
    %496 = vmatpush2.xpose.msra.mxu0 0.0
    %497 = vmatprep.subr.mxu0 0.0
    %498 = vmatpush2.xpose.msra.mxu0 0.0
    %499 = vmatprep.subr.mxu0 0.0
    %500 = vmatpush2.xpose.msra.mxu0 0.0
    %501 = vmatprep.subr.mxu0 0.0
    %502 = vmatpush2.xpose.msra.mxu0 0.0
    %503 = vmatprep.subr.mxu0 0.0
    %504 = vmatpush2.xpose.msra.mxu0 0.0
    %505 = vmatprep.subr.mxu0 0.0
    %506 = vmatpush2.xpose.msra.mxu0 0.0
    %507 = vmatprep.subr.mxu0 0.0
    %508 = vmatpush2.xpose.msra.mxu0 0.0
    %509 = vmatprep.subr.mxu0 0.0
    %510 = vmatpush2.xpose.msra.mxu0 0.0
    %511 = vmatprep.mubr.f32.mxu0 0.0
    %v512 = vand.u32 %v35, 4294901760
    %v513 = vsub.f32 %v35, %v512
    %v514 = vand.u32 %v513, 4294901760
    %515 = vmatmul.mubr.f32.gmra.mxu0 %v514
    %v516 = vpop.f32.mrf.mxu0
    %v517 = vadd.f32 %v428, %v516
    %v518 = vpop.f32.mrf.mxu0
    %519 = vdwg.mxu0
    %520 = vmatprep.subr.mxu0 0.0
    %v521 = vand.u32 %v83, 4294901760
    %v522 = vsub.f32 %v83, %v521
    %v523 = vand.u32 %v522, 4294901760
    %524 = vmatpush1.xpose.msra.mxu0 %v523
    %525 = vmatprep.subr.mxu0 0.0
    %v526 = vand.u32 %v80, 4294901760
    %v527 = vsub.f32 %v80, %v526
    %v528 = vand.u32 %v527, 4294901760
    %529 = vmatpush1.xpose.msra.mxu0 %v528
    %530 = vmatprep.subr.mxu0 0.0
    %v531 = vand.u32 %v77, 4294901760
    %v532 = vsub.f32 %v77, %v531
    %v533 = vand.u32 %v532, 4294901760
    %534 = vmatpush1.xpose.msra.mxu0 %v533
    %535 = vmatprep.subr.mxu0 0.0
    %v536 = vand.u32 %v74, 4294901760
    %v537 = vsub.f32 %v74, %v536
    %v538 = vand.u32 %v537, 4294901760
    %539 = vmatpush1.xpose.msra.mxu0 %v538
    %540 = vmatprep.subr.mxu0 0.0
    %v541 = vand.u32 %v71, 4294901760
    %v542 = vsub.f32 %v71, %v541
    %v543 = vand.u32 %v542, 4294901760
    %544 = vmatpush1.xpose.msra.mxu0 %v543
    %545 = vmatprep.subr.mxu0 0.0
    %v546 = vand.u32 %v68, 4294901760
    %v547 = vsub.f32 %v68, %v546
    %v548 = vand.u32 %v547, 4294901760
    %549 = vmatpush1.xpose.msra.mxu0 %v548
    %550 = vmatprep.subr.mxu0 0.0
    %v551 = vand.u32 %v65, 4294901760
    %v552 = vsub.f32 %v65, %v551
    %v553 = vand.u32 %v552, 4294901760
    %554 = vmatpush1.xpose.msra.mxu0 %v553
    %555 = vmatprep.subr.mxu0 0.0
    %v556 = vand.u32 %v62, 4294901760
    %v557 = vsub.f32 %v62, %v556
    %v558 = vand.u32 %v557, 4294901760
    %559 = vmatpush1.xpose.msra.mxu0 %v558
    %560 = vmatprep.subr.mxu0 0.0
    %v561 = vand.u32 %v59, 4294901760
    %v562 = vsub.f32 %v59, %v561
    %v563 = vand.u32 %v562, 4294901760
    %564 = vmatpush1.xpose.msra.mxu0 %v563
    %565 = vmatprep.subr.mxu0 0.0
    %v566 = vand.u32 %v56, 4294901760
    %v567 = vsub.f32 %v56, %v566
    %v568 = vand.u32 %v567, 4294901760
    %569 = vmatpush1.xpose.msra.mxu0 %v568
    %570 = vmatprep.subr.mxu0 0.0
    %v571 = vand.u32 %v53, 4294901760
    %v572 = vsub.f32 %v53, %v571
    %v573 = vand.u32 %v572, 4294901760
    %574 = vmatpush1.xpose.msra.mxu0 %v573
    %575 = vmatprep.subr.mxu0 0.0
    %v576 = vand.u32 %v50, 4294901760
    %v577 = vsub.f32 %v50, %v576
    %v578 = vand.u32 %v577, 4294901760
    %579 = vmatpush1.xpose.msra.mxu0 %v578
    %580 = vmatprep.subr.mxu0 0.0
    %v581 = vand.u32 %v47, 4294901760
    %v582 = vsub.f32 %v47, %v581
    %v583 = vand.u32 %v582, 4294901760
    %584 = vmatpush1.xpose.msra.mxu0 %v583
    %585 = vmatprep.subr.mxu0 0.0
    %v586 = vand.u32 %v44, 4294901760
    %v587 = vsub.f32 %v44, %v586
    %v588 = vand.u32 %v587, 4294901760
    %589 = vmatpush1.xpose.msra.mxu0 %v588
    %590 = vmatprep.subr.mxu0 0.0
    %v591 = vand.u32 %v41, 4294901760
    %v592 = vsub.f32 %v41, %v591
    %v593 = vand.u32 %v592, 4294901760
    %594 = vmatpush1.xpose.msra.mxu0 %v593
    %595 = vmatprep.subr.mxu0 0.0
    %v596 = vand.u32 %v38, 4294901760
    %v597 = vsub.f32 %v38, %v596
    %v598 = vand.u32 %v597, 4294901760
    %599 = vmatpush1.xpose.msra.mxu0 %v598
    %600 = vmatprep.subr.mxu0 0.0
    %601 = vmatpush2.xpose.msra.mxu0 0.0
    %602 = vmatprep.subr.mxu0 0.0
    %603 = vmatpush2.xpose.msra.mxu0 0.0
    %604 = vmatprep.subr.mxu0 0.0
    %605 = vmatpush2.xpose.msra.mxu0 0.0
    %606 = vmatprep.subr.mxu0 0.0
    %607 = vmatpush2.xpose.msra.mxu0 0.0
    %608 = vmatprep.subr.mxu0 0.0
    %609 = vmatpush2.xpose.msra.mxu0 0.0
    %610 = vmatprep.subr.mxu0 0.0
    %611 = vmatpush2.xpose.msra.mxu0 0.0
    %612 = vmatprep.subr.mxu0 0.0
    %613 = vmatpush2.xpose.msra.mxu0 0.0
    %614 = vmatprep.subr.mxu0 0.0
    %615 = vmatpush2.xpose.msra.mxu0 0.0
    %616 = vmatprep.subr.mxu0 0.0
    %617 = vmatpush2.xpose.msra.mxu0 0.0
    %618 = vmatprep.subr.mxu0 0.0
    %619 = vmatpush2.xpose.msra.mxu0 0.0
    %620 = vmatprep.subr.mxu0 0.0
    %621 = vmatpush2.xpose.msra.mxu0 0.0
    %622 = vmatprep.subr.mxu0 0.0
    %623 = vmatpush2.xpose.msra.mxu0 0.0
    %624 = vmatprep.subr.mxu0 0.0
    %625 = vmatpush2.xpose.msra.mxu0 0.0
    %626 = vmatprep.subr.mxu0 0.0
    %627 = vmatpush2.xpose.msra.mxu0 0.0
    %628 = vmatprep.subr.mxu0 0.0
    %629 = vmatpush2.xpose.msra.mxu0 0.0
    %630 = vmatprep.subr.mxu0 0.0
    %631 = vmatpush2.xpose.msra.mxu0 0.0
    %632 = vmatprep.mubr.f32.mxu0 0.0
    %v633 = vand.u32 %v35, 4294901760
    %634 = vmatmul.mubr.f32.gmra.mxu0 %v633
    %v635 = vpop.f32.mrf.mxu0
    %v636 = vadd.f32 %v517, %v635
    %v637 = vpop.f32.mrf.mxu0
    %638 = vdwg.mxu0
    %639 = vmatprep.subr.mxu0 0.0
    %v640 = vand.u32 %v83, 4294901760
    %641 = vmatpush1.xpose.msra.mxu0 %v640
    %642 = vmatprep.subr.mxu0 0.0
    %v643 = vand.u32 %v80, 4294901760
    %644 = vmatpush1.xpose.msra.mxu0 %v643
    %645 = vmatprep.subr.mxu0 0.0
    %v646 = vand.u32 %v77, 4294901760
    %647 = vmatpush1.xpose.msra.mxu0 %v646
    %648 = vmatprep.subr.mxu0 0.0
    %v649 = vand.u32 %v74, 4294901760
    %650 = vmatpush1.xpose.msra.mxu0 %v649
    %651 = vmatprep.subr.mxu0 0.0
    %v652 = vand.u32 %v71, 4294901760
    %653 = vmatpush1.xpose.msra.mxu0 %v652
    %654 = vmatprep.subr.mxu0 0.0
    %v655 = vand.u32 %v68, 4294901760
    %656 = vmatpush1.xpose.msra.mxu0 %v655
    %657 = vmatprep.subr.mxu0 0.0
    %v658 = vand.u32 %v65, 4294901760
    %659 = vmatpush1.xpose.msra.mxu0 %v658
    %660 = vmatprep.subr.mxu0 0.0
    %v661 = vand.u32 %v62, 4294901760
    %662 = vmatpush1.xpose.msra.mxu0 %v661
    %663 = vmatprep.subr.mxu0 0.0
    %v664 = vand.u32 %v59, 4294901760
    %665 = vmatpush1.xpose.msra.mxu0 %v664
    %666 = vmatprep.subr.mxu0 0.0
    %v667 = vand.u32 %v56, 4294901760
    %668 = vmatpush1.xpose.msra.mxu0 %v667
    %669 = vmatprep.subr.mxu0 0.0
    %v670 = vand.u32 %v53, 4294901760
    %671 = vmatpush1.xpose.msra.mxu0 %v670
    %672 = vmatprep.subr.mxu0 0.0
    %v673 = vand.u32 %v50, 4294901760
    %674 = vmatpush1.xpose.msra.mxu0 %v673
    %675 = vmatprep.subr.mxu0 0.0
    %v676 = vand.u32 %v47, 4294901760
    %677 = vmatpush1.xpose.msra.mxu0 %v676
    %678 = vmatprep.subr.mxu0 0.0
    %v679 = vand.u32 %v44, 4294901760
    %680 = vmatpush1.xpose.msra.mxu0 %v679
    %681 = vmatprep.subr.mxu0 0.0
    %v682 = vand.u32 %v41, 4294901760
    %683 = vmatpush1.xpose.msra.mxu0 %v682
    %684 = vmatprep.subr.mxu0 0.0
    %v685 = vand.u32 %v38, 4294901760
    %686 = vmatpush1.xpose.msra.mxu0 %v685
    %687 = vmatprep.subr.mxu0 0.0
    %688 = vmatpush2.xpose.msra.mxu0 0.0
    %689 = vmatprep.subr.mxu0 0.0
    %690 = vmatpush2.xpose.msra.mxu0 0.0
    %691 = vmatprep.subr.mxu0 0.0
    %692 = vmatpush2.xpose.msra.mxu0 0.0
    %693 = vmatprep.subr.mxu0 0.0
    %694 = vmatpush2.xpose.msra.mxu0 0.0
    %695 = vmatprep.subr.mxu0 0.0
    %696 = vmatpush2.xpose.msra.mxu0 0.0
    %697 = vmatprep.subr.mxu0 0.0
    %698 = vmatpush2.xpose.msra.mxu0 0.0
    %699 = vmatprep.subr.mxu0 0.0
    %700 = vmatpush2.xpose.msra.mxu0 0.0
    %701 = vmatprep.subr.mxu0 0.0
    %702 = vmatpush2.xpose.msra.mxu0 0.0
    %703 = vmatprep.subr.mxu0 0.0
    %704 = vmatpush2.xpose.msra.mxu0 0.0
    %705 = vmatprep.subr.mxu0 0.0
    %706 = vmatpush2.xpose.msra.mxu0 0.0
    %707 = vmatprep.subr.mxu0 0.0
    %708 = vmatpush2.xpose.msra.mxu0 0.0
    %709 = vmatprep.subr.mxu0 0.0
    %710 = vmatpush2.xpose.msra.mxu0 0.0
    %711 = vmatprep.subr.mxu0 0.0
    %712 = vmatpush2.xpose.msra.mxu0 0.0
    %713 = vmatprep.subr.mxu0 0.0
    %714 = vmatpush2.xpose.msra.mxu0 0.0
    %715 = vmatprep.subr.mxu0 0.0
    %716 = vmatpush2.xpose.msra.mxu0 0.0
    %717 = vmatprep.subr.mxu0 0.0
    %718 = vmatpush2.xpose.msra.mxu0 0.0
    %719 = vmatprep.mubr.f32.mxu0 0.0
    %v720 = vand.u32 %v35, 4294901760
    %721 = vmatmul.mubr.f32.gmra.mxu0 %v720
    %v722 = vpop.f32.mrf.mxu0
    %v723 = vadd.f32 %v636, %v722
    %v724 = vpop.f32.mrf.mxu0
    %725 = vdwg.mxu0
    %s726 = sld [smem:[#allocation2]]
    %v727 = vstv %s726
    %v728 = vadd.f32 %v723, %v727
    %v729 = vxor.u32 %v728, 2147483648
    %v730 = vmul.f32 %v729, 1.442695
    %v731 = vpow.pop %v730
    %v732 = vadd.f32 %v731, 1.0
    %v733 = vrcp.pop %v732
    %v734 = vmul.f32 1.0, %v733
    %735 = vst [vmem:[#allocation3] sm:$0x1] %v734
    // Predicated region
    $region14: #{tpu_custom_call.1} parent=1 // pred_check
      _
    $region15: #{tpu_custom_call.1} parent=1 // pred_check_branch
      %737 = sbr.rel (0) target = $region17
    $region16: #{tpu_custom_call.1} parent=1 // pred_region
      %s739 = ssub.s32 16, 16
      %740 = vsyncadd [#allocation4], %s739
      %s742 = sshll.u32 [#allocation3], 4
      %s743 = int_to_ptr.vmem [resolvable:$true] %s742
      %745 = dma.vmem_to_hbm [thread:$0]  %s743, 16, %s3, [#allocation4]
    $region17: #{tpu_custom_call.1} parent=1 // pred_fallthru
      _
    // Predicated region
    $region18: #{tpu_custom_call.1} parent=1 // pred_check
      _
    $region19: #{tpu_custom_call.1} parent=1 // pred_check_branch
      %747 = sbr.rel (0) target = $region21
    $region20: #{tpu_custom_call.1} parent=1 // pred_region
      %748 = dma.done [#allocation4], 16
    $region21: #{tpu_custom_call.1} parent=1 // pred_fallthru
      _
    %749 = vsyncpa [#allocation4], 1

</llo_original>
